<compile_context>
chip_gen: v5e
topology: v5e:2x2
jax: 0.10.0
libtpu: 0.0.40
codegen_flags: <defaults>
</compile_context>

<pallas_src>
import math
from typing import NamedTuple

import jax
import jax.numpy as jnp
from jax.experimental import pallas as pl
from jax.experimental.pallas import tpu as pltpu


# ---------------------------------------------------------------------------
# Kernel
# ---------------------------------------------------------------------------
def ffn_kernel(x_ref, w1_ref, b1_ref, w2_ref, b2_ref, o_ref):
    """One row-tile of   y = relu(x @ W1 + b1) @ W2 + b2   (dropout p=0 == id).

    x_ref:  (tr, f*d_in)      row tile of the folded input (compute dtype)
    w1_ref: (f*d_in, f*d_ff)  block-diagonal weight, VMEM resident
    b1_ref: (1, f*d_ff)       f32
    w2_ref: (f*d_ff, f*d_out) block-diagonal weight, VMEM resident
    b2_ref: (1, f*d_out)      f32
    o_ref:  (tr, f*d_out)     lane-dense output tile
    """
    h = jnp.dot(x_ref[...], w1_ref[...], preferred_element_type=jnp.float32)
    h = jnp.maximum(h + b1_ref[...], 0.0)          # bias + ReLU in f32 on the VPU
    # nn.Dropout(p=0.0) is the identity -> nothing to do.
    y = jnp.dot(h.astype(w2_ref.dtype), w2_ref[...],
                preferred_element_type=jnp.float32)
    o_ref[...] = (y + b2_ref[...]).astype(o_ref.dtype)


# ---------------------------------------------------------------------------
# One-time parameter preparation (hoisted out of the per-call wrapper)
# ---------------------------------------------------------------------------
class FFNConfig(NamedTuple):        # static (hashable) config
    fold: int
    d_in: int
    d_ff: int
    d_out: int


class FFNParams(NamedTuple):        # array pytree
    w1_f: jax.Array                 # (f*d_in, f*d_ff)  compute dtype
    b1_f: jax.Array                 # (1, f*d_ff)       f32
    w2_f: jax.Array                 # (f*d_ff, f*d_out) compute dtype
    b2_f: jax.Array                 # (1, f*d_out)      f32


def _block_diag(w, f):
    """f copies of w on the diagonal: (a, b) -> (f*a, f*b)."""
    if f == 1:
        return w
    return jnp.kron(jnp.eye(f, dtype=w.dtype), w)


def _choose_fold(d_in, d_ff, d_out, itemsize):
    lane = 128
    f_in = lane // math.gcd(d_in, lane)
    f_out = lane // math.gcd(d_out, lane)
    f = (f_in * f_out) // math.gcd(f_in, f_out)
    # keep the block-diagonal weight blow-up bounded; otherwise don't fold
    if f > 8 or f * f * (d_in * d_ff + d_ff * d_out) * itemsize > (4 << 20):
        f = 1
    return f


def prepare_ffn(w1, b1, w2, b2, *, compute_dtype=jnp.bfloat16):
    """Build folded (block-diagonal) weights / tiled biases ONCE.

    Call at init / whenever params change; apply_ffn() then does no weight-side
    work per forward call.
    """
    d_in, d_ff = w1.shape
    d_ff2, d_out = w2.shape
    assert d_ff == d_ff2 and b1.shape == (d_ff,) and b2.shape == (d_out,)

    cdt = jnp.dtype(compute_dtype) if compute_dtype is not None else jnp.dtype(w1.dtype)
    f = _choose_fold(d_in, d_ff, d_out, cdt.itemsize)

    params = FFNParams(
        w1_f=_block_diag(w1, f).astype(cdt),
        b1_f=jnp.tile(b1.reshape(1, d_ff), (1, f)).astype(jnp.float32),
        w2_f=_block_diag(w2, f).astype(cdt),
        b2_f=jnp.tile(b2.reshape(1, d_out), (1, f)).astype(jnp.float32),
    )
    cfg = FFNConfig(fold=f, d_in=d_in, d_ff=d_ff, d_out=d_out)
    return params, cfg


# ---------------------------------------------------------------------------
# Forward
# ---------------------------------------------------------------------------
_VMEM_TILE_BUDGET = 24 << 20   # tile budget: comfortably inside v7x 64 MiB VMEM
_VMEM_LIMIT_CAP = 48 << 20


def apply_ffn(params, cfg, x, *, tr_target=4096, out_dtype=None):
    """x: [..., d_in] -> [..., d_out].

    tr_target: target row tile in *folded* rows (1 folded row == cfg.fold
               original rows); clamped by an explicit VMEM budget.
    out_dtype: output dtype (default: x.dtype).  Pass bf16 if the consumer
               accepts it to halve store-side HBM traffic.
    """
    f, d_in, d_ff, d_out = cfg.fold, cfg.d_in, cfg.d_ff, cfg.d_out
    din_f, dff_f, dout_f = f * d_in, f * d_ff, f * d_out
    cdt = params.w1_f.dtype
    out_dtype = jnp.dtype(x.dtype if out_dtype is None else out_dtype)

    lead = x.shape[:-1]
    assert x.shape[-1] == d_in
    m = 1
    for s in lead:
        m *= s
    x2d = x.reshape(m, d_in)

    # ---- minimal row padding: only what the fold itself requires, plus a tiny
    #      pad for inputs smaller than one (8,128) tile.  Common (aligned) case:
    #      no pad, no output slice -> no extra HBM passes.
    r = max(-(-m // f), 8)
    m_f = r * f
    if m_f != m:
        x2d = jnp.pad(x2d, ((0, m_f - m), (0, 0)))
    x_f = x2d.reshape(r, din_f)            # byte-identical row-major reshape (free)
    if x_f.dtype != cdt:
        # Fuses into x's producer when traced under the caller's jit; pass x
        # already in the compute dtype to avoid any cast pass entirely.
        x_f = x_f.astype(cdt)

    # ---- adaptive row tile: MB-scale per grid step, capped by a VMEM budget ----
    x_b, o_b, w_b = cdt.itemsize, out_dtype.itemsize, cdt.itemsize
    per_row = (2 * din_f * x_b           # x tile, double-buffered
               + 2 * dout_f * o_b        # out tile, double-buffered
               + dff_f * 4               # h accumulator (f32)
               + dff_f * x_b             # h cast for the 2nd matmul
               + dout_f * 4)             # 2nd matmul accumulator (f32)
    w_bytes = (2 * (din_f * dff_f + dff_f * dout_f) * w_b    # weights (dbl-buffered)
               + 2 * (dff_f + dout_f) * 4)                   # biases
    tr_cap = max(8, ((_VMEM_TILE_BUDGET - w_bytes) // per_row) // 8 * 8)
    tr_target = max(8, (min(tr_target, tr_cap) // 8) * 8)

    if r <= tr_target:
        tr = r                 # one resident tile; block == full array rows
        grid = (1,)
    else:
        tr = tr_target         # multiple of 8; ragged last block is masked by Pallas
        grid = (pl.cdiv(r, tr),)

    vmem_limit = int(min(_VMEM_LIMIT_CAP,
                         max(32 << 20, 2 * (tr * per_row + w_bytes))))

    out_f = pl.pallas_call(
        ffn_kernel,
        out_shape=jax.ShapeDtypeStruct((r, dout_f), out_dtype),
        grid_spec=pltpu.PrefetchScalarGridSpec(
            num_scalar_prefetch=0,
            grid=grid,
            in_specs=[
                pl.BlockSpec((tr, din_f), lambda i: (i, 0)),
                # Constant-index weight/bias blocks: fetched once, stay resident
                # (their double-buffer footprint is already counted in w_bytes
                # and is tiny vs. the tile budget).
                pl.BlockSpec((din_f, dff_f), lambda i: (0, 0)),
                pl.BlockSpec((1, dff_f), lambda i: (0, 0)),
                pl.BlockSpec((dff_f, dout_f), lambda i: (0, 0)),
                pl.BlockSpec((1, dout_f), lambda i: (0, 0)),
            ],
            out_specs=pl.BlockSpec((tr, dout_f), lambda i: (i, 0)),
        ),
        compiler_params=pltpu.CompilerParams(
            # Rows axis is "parallel": v7x's two TensorCores split it whenever
            # grid >= 2, which (with MB-scale tiles) is exactly when each core
            # gets enough bytes to amortize the per-step overhead.  On v5e/v6e
            # (one TC) the size-based tiling avoids needless extra grid steps,
            # so no chip-version gating is required.
            dimension_semantics=("parallel",),
            vmem_limit_bytes=vmem_limit,
        ),
    )(x_f, params.w1_f, params.b1_f, params.w2_f, params.b2_f)

    out2d = out_f.reshape(m_f, d_out)
    if m_f != m:
        out2d = out2d[:m]
    return out2d.reshape(*lead, d_out)


def positionwise_ffn(x, w1, b1, w2, b2, *, compute_dtype=jnp.bfloat16,
                     tr_target=4096, out_dtype=None):
    """One-shot convenience wrapper (re-prepares folded weights every call).
    For repeated use, call prepare_ffn() once and apply_ffn() per step."""
    params, cfg = prepare_ffn(w1, b1, w2, b2, compute_dtype=compute_dtype)
    return apply_ffn(params, cfg, x, tr_target=tr_target, out_dtype=out_dtype)


# ---------------------------------------------------------------------------
# Parameter init (matches nn.Linear's U(-1/sqrt(fan_in), 1/sqrt(fan_in)))
# ---------------------------------------------------------------------------
def init_params(key, input_dim, output_dim, d_ff):
    k1, k2, k3, k4 = jax.random.split(key, 4)
    bound1 = 1.0 / (input_dim ** 0.5)
    bound2 = 1.0 / (d_ff ** 0.5)
    # stored as [in, out] (transpose of torch's [out, in]) so the kernel does x @ W
    w1 = jax.random.uniform(k1, (input_dim, d_ff), jnp.float32, -bound1, bound1)
    b1 = jax.random.uniform(k2, (d_ff,), jnp.float32, -bound1, bound1)
    w2 = jax.random.uniform(k3, (d_ff, output_dim), jnp.float32, -bound2, bound2)
    b2 = jax.random.uniform(k4, (output_dim,), jnp.float32, -bound2, bound2)
    return w1, b1, w2, b2


if __name__ == "__main__":
    # module config: input_dim=32, output_dim=32 -> d_ff = 4*output_dim = 128
    batch, seq, input_dim, output_dim = 2, 8, 32, 32
    d_ff = output_dim * 4

    key = jax.random.PRNGKey(0)
    kx, kp = jax.random.split(key)
    x = jax.random.normal(kx, (batch, seq, input_dim), jnp.float32)
    w1, b1, w2, b2 = init_params(kp, input_dim, output_dim, d_ff)

    # pure-JAX reference
    ref = jnp.maximum(x @ w1 + b1, 0.0) @ w2 + b2

    fwd = jax.jit(apply_ffn, static_argnums=(1,))

    # f32 path: matches the PyTorch module's numerics (tight tolerance)
    params32, cfg32 = prepare_ffn(w1, b1, w2, b2, compute_dtype=jnp.float32)
    y32 = jax.block_until_ready(fwd(params32, cfg32, x))
    assert y32.shape == (batch, seq, output_dim)
    assert jnp.allclose(y32, ref, atol=1e-5, rtol=1e-5), "f32 mismatch vs reference"

    # default bf16-operand path (memory-bound optimization), looser tolerance;
    # traced under jit so the x cast fuses with its producer.
    params16, cfg16 = prepare_ffn(w1, b1, w2, b2)          # compute_dtype=bf16
    y16 = jax.block_until_ready(fwd(params16, cfg16, x))
    assert y16.shape == (batch, seq, output_dim)
    assert jnp.allclose(y16, ref, atol=1e-1, rtol=1e-1), "bf16 mismatch vs reference"

    # TODO(synk): nn.Dropout with p > 0 (training mode) would need pltpu PRNG;
    # the module default p=0.0 is the identity, which is what is implemented.
    print("KERNEL_OK")
</pallas_src>

<mosaic_0001>
module attributes {stable_mosaic.version = 11 : i64} {
  func.func @ffn_kernel(%arg0: i32, %arg1: memref<8x128xf32, #tpu.memory_space<vmem>>, %arg2: memref<128x512xf32, #tpu.memory_space<vmem>>, %arg3: memref<1x512xf32, #tpu.memory_space<vmem>>, %arg4: memref<512x128xf32, #tpu.memory_space<vmem>>, %arg5: memref<1x128xf32, #tpu.memory_space<vmem>>, %arg6: memref<8x128xf32, #tpu.memory_space<vmem>>) attributes {dimension_semantics = [#tpu.dimension_semantics<parallel>], iteration_bounds = array<i64: 1>, scalar_prefetch = 0 : i64, scratch_operands = 0 : i64, tpu.core_type = #tpu.core_type<tc>, window_params = [{transform_indices = @transform_0, window_bounds = array<i64: 8, 128>}, {pipeline_mode = #tpu.pipeline_mode<synchronous>, transform_indices = @transform_1, window_bounds = array<i64: 128, 512>}, {pipeline_mode = #tpu.pipeline_mode<synchronous>, transform_indices = @transform_2, window_bounds = array<i64: 1, 512>}, {pipeline_mode = #tpu.pipeline_mode<synchronous>, transform_indices = @transform_3, window_bounds = array<i64: 512, 128>}, {pipeline_mode = #tpu.pipeline_mode<synchronous>, transform_indices = @transform_4, window_bounds = array<i64: 1, 128>}, {transform_indices = @transform_5, window_bounds = array<i64: 8, 128>}]} {
    %c0 = arith.constant 0 : index
    %c0_0 = arith.constant 0 : index
    %0 = vector.load %arg1[%c0, %c0_0] : memref<8x128xf32, #tpu.memory_space<vmem>>, vector<8x128xf32>
    %c0_1 = arith.constant 0 : index
    %c0_2 = arith.constant 0 : index
    %1 = vector.load %arg2[%c0_1, %c0_2] : memref<128x512xf32, #tpu.memory_space<vmem>>, vector<128x512xf32>
    %cst = arith.constant dense<0.000000e+00> : vector<8x512xf32>
    %2 = tpu.matmul %0, %1, %cst {dimension_numbers = #tpu.dot_dimension_numbers<[1], [0], [0], [1], [0, 0, 1, 1], [], []>} : vector<8x128xf32>, vector<128x512xf32>, vector<8x512xf32> -> vector<8x512xf32>
    %c0_3 = arith.constant 0 : index
    %c0_4 = arith.constant 0 : index
    %3 = vector.load %arg3[%c0_3, %c0_4] : memref<1x512xf32, #tpu.memory_space<vmem>>, vector<1x512xf32>
    %4 = vector.broadcast %3 : vector<1x512xf32> to vector<8x512xf32>
    %5 = arith.addf %2, %4 : vector<8x512xf32>
    %cst_5 = arith.constant 0.000000e+00 : f32
    %6 = vector.broadcast %cst_5 : f32 to vector<8x512xf32>
    %7 = arith.maximumf %5, %6 : vector<8x512xf32>
    %c0_6 = arith.constant 0 : index
    %c0_7 = arith.constant 0 : index
    %8 = vector.load %arg4[%c0_6, %c0_7] : memref<512x128xf32, #tpu.memory_space<vmem>>, vector<512x128xf32>
    %cst_8 = arith.constant dense<0.000000e+00> : vector<8x128xf32>
    %9 = tpu.matmul %7, %8, %cst_8 {dimension_numbers = #tpu.dot_dimension_numbers<[1], [0], [0], [1], [0, 0, 1, 1], [], []>} : vector<8x512xf32>, vector<512x128xf32>, vector<8x128xf32> -> vector<8x128xf32>
    %c0_9 = arith.constant 0 : index
    %c0_10 = arith.constant 0 : index
    %10 = vector.load %arg5[%c0_9, %c0_10] : memref<1x128xf32, #tpu.memory_space<vmem>>, vector<1x128xf32>
    %11 = vector.broadcast %10 : vector<1x128xf32> to vector<8x128xf32>
    %12 = arith.addf %9, %11 : vector<8x128xf32>
    %c0_11 = arith.constant 0 : index
    %c0_12 = arith.constant 0 : index
    %13 = vector.load %arg6[%c0_11, %c0_12] : memref<8x128xf32, #tpu.memory_space<vmem>>, vector<8x128xf32>
    tpu.vector_store %arg6[%c0_11, %c0_12], %12 {strides = array<i32>} : memref<8x128xf32, #tpu.memory_space<vmem>>, vector<8x128xf32>,
    return
  }
  func.func @transform_0(%arg0: i32) -> (i32, i32) {
    %c0_i32 = arith.constant 0 : i32
    %c0_i32_0 = arith.constant 0 : i32
    return %arg0, %c0_i32 : i32, i32
  }
  func.func @transform_1(%arg0: i32) -> (i32, i32) {
    %c0_i32 = arith.constant 0 : i32
    %c0_i32_0 = arith.constant 0 : i32
    %c0_i32_1 = arith.constant 0 : i32
    return %c0_i32, %c0_i32_0 : i32, i32
  }
  func.func @transform_2(%arg0: i32) -> (i32, i32) {
    %c0_i32 = arith.constant 0 : i32
    %c0_i32_0 = arith.constant 0 : i32
    %c0_i32_1 = arith.constant 0 : i32
    return %c0_i32, %c0_i32_0 : i32, i32
  }
  func.func @transform_3(%arg0: i32) -> (i32, i32) {
    %c0_i32 = arith.constant 0 : i32
    %c0_i32_0 = arith.constant 0 : i32
    %c0_i32_1 = arith.constant 0 : i32
    return %c0_i32, %c0_i32_0 : i32, i32
  }
  func.func @transform_4(%arg0: i32) -> (i32, i32) {
    %c0_i32 = arith.constant 0 : i32
    %c0_i32_0 = arith.constant 0 : i32
    %c0_i32_1 = arith.constant 0 : i32
    return %c0_i32, %c0_i32_0 : i32, i32
  }
  func.func @transform_5(%arg0: i32) -> (i32, i32) {
    %c0_i32 = arith.constant 0 : i32
    %c0_i32_0 = arith.constant 0 : i32
    return %arg0, %c0_i32 : i32, i32
  }
}

</mosaic_0001>

<llo_original>
// kernel: apply_ffn.1
$region0: #{apply_ffn.1}
  #allocation0 [shape = 'u32[]', space=smem, size = 0x4, offset = 0x4, fixed_abs, tag = 'smem constant byte address 0x4 - core index']
  #allocation1 [shape = 'u32[72,128]{1,0:T(1,128)}', space=vmem, size = 0x9000, scoped, tag = 'internal scratch']
  %s0 = inlined_call_operand.vmem [shape: f32[8,128], index: 0, kind: input, shape index: {}]
  %s1 = inlined_call_operand.hbm [shape: f32[128,512], index: 1, kind: input, shape index: {}]
  %s2 = inlined_call_operand.vmem [shape: f32[1,512], index: 2, kind: input, shape index: {}]
  %s3 = inlined_call_operand.hbm [shape: f32[512,128], index: 3, kind: input, shape index: {}]
  %s4 = inlined_call_operand.vmem [shape: f32[1,128], index: 4, kind: input, shape index: {}]
  %s5 = inlined_call_operand.vmem [shape: f32[8,128], index: 5, kind: output, shape index: {}]
  %s6 = sld [smem:[#allocation0]]
  $region38: #{apply_ffn.1} parent=0
    _
  %s8 = ssub.s32 1, %s6
  %s9 = scalar_select 0, %s8, %s6
  $region1: #{apply_ffn.1} parent=0
    #allocation2 [shape = 'u8[262144]{0}', space=vmem, size = 0x40000, scoped, tag = 'input window, operand 1, single buffered']
    #allocation3 [shape = 's32[1]{0}', space=sflag, size = 0x4, scoped, tag = 'scoped memory for apply_ffn.1']
    #allocation4 [shape = 'u8[262144]{0}', space=vmem, size = 0x40000, scoped, tag = 'input window, operand 3, single buffered']
    #allocation5 [shape = 's32[1]{0}', space=sflag, size = 0x4, scoped, tag = 'scoped memory for apply_ffn.1']
    %10 = vsyncpa [#allocation3], 0
    %11 = vsyncpa [#allocation5], 0
    // Predicated region
    $region2: #{apply_ffn.1} parent=1 // pred_check
      _
    $region3: #{apply_ffn.1} parent=1 // pred_check_branch
      %13 = sbr.rel (0) target = $region5
    $region4: #{apply_ffn.1} parent=1 // pred_region
      _
    $region5: #{apply_ffn.1} parent=1 // pred_fallthru
      _
    // Predicated region
    $region6: #{apply_ffn.1} parent=1 // pred_check
      _
    $region7: #{apply_ffn.1} parent=1 // pred_check_branch
      %15 = sbr.rel (0) target = $region9
    $region8: #{apply_ffn.1} parent=1 // pred_region
      %17 = vsyncadd [#allocation3], 0
      %s18 = sshll.u32 %s1, 4
      %s19 = int_to_ptr.hbm [resolvable:$true] %s18
      %s20 = sshll.u32 [#allocation2], 4
      %s21 = int_to_ptr.vmem [resolvable:$true] %s20
      %26 = dma.hbm_to_vmem [thread:$0]  %s19, 8192, %s21, [#allocation3], 512, 512, 32
    $region9: #{apply_ffn.1} parent=1 // pred_fallthru
      _
    // Predicated region
    $region10: #{apply_ffn.1} parent=1 // pred_check
      _
    $region11: #{apply_ffn.1} parent=1 // pred_check_branch
      %28 = sbr.rel (0) target = $region13
    $region12: #{apply_ffn.1} parent=1 // pred_region
      _
    $region13: #{apply_ffn.1} parent=1 // pred_fallthru
      _
    // Predicated region
    $region14: #{apply_ffn.1} parent=1 // pred_check
      _
    $region15: #{apply_ffn.1} parent=1 // pred_check_branch
      %30 = sbr.rel (0) target = $region17
    $region16: #{apply_ffn.1} parent=1 // pred_region
      %32 = vsyncadd [#allocation5], 0
      %s33 = sshll.u32 %s3, 4
      %s34 = int_to_ptr.hbm [resolvable:$true] %s33
      %s35 = sshll.u32 [#allocation4], 4
      %s36 = int_to_ptr.vmem [resolvable:$true] %s35
      %41 = dma.hbm_to_vmem [thread:$0]  %s34, 8192, %s36, [#allocation5], 128, 128, 8
    $region17: #{apply_ffn.1} parent=1 // pred_fallthru
      _
    // Predicated region
    $region18: #{apply_ffn.1} parent=1 // pred_check
      _
    $region19: #{apply_ffn.1} parent=1 // pred_check_branch
      %43 = sbr.rel (0) target = $region21
    $region20: #{apply_ffn.1} parent=1 // pred_region
      _
    $region21: #{apply_ffn.1} parent=1 // pred_fallthru
      _
    // Predicated region
    $region22: #{apply_ffn.1} parent=1 // pred_check
      _
    $region23: #{apply_ffn.1} parent=1 // pred_check_branch
      %45 = sbr.rel (0) target = $region25
    $region24: #{apply_ffn.1} parent=1 // pred_region
      %47 = dma.done [#allocation3], 8192
    $region25: #{apply_ffn.1} parent=1 // pred_fallthru
      _
    // Predicated region
    $region26: #{apply_ffn.1} parent=1 // pred_check
      _
    $region27: #{apply_ffn.1} parent=1 // pred_check_branch
      %49 = sbr.rel (0) target = $region29
    $region28: #{apply_ffn.1} parent=1 // pred_region
      %51 = dma.done [#allocation5], 8192
    $region29: #{apply_ffn.1} parent=1 // pred_fallthru
      _
    %v52 = vld [vmem:[%s0] sm:$0xff]
    %v53 = vld [vmem:[#allocation2] sm:$0xff]
    %v54 = vld [vmem:[#allocation2 + $0x8] sm:$0xff]
    %v55 = vld [vmem:[#allocation2 + $0x10] sm:$0xff]
    %v56 = vld [vmem:[#allocation2 + $0x18] sm:$0xff]
    %v57 = vld [vmem:[#allocation2 + $0x20] sm:$0xff]
    %v58 = vld [vmem:[#allocation2 + $0x28] sm:$0xff]
    %v59 = vld [vmem:[#allocation2 + $0x30] sm:$0xff]
    %v60 = vld [vmem:[#allocation2 + $0x38] sm:$0xff]
    %v61 = vld [vmem:[#allocation2 + $0x40] sm:$0xff]
    %v62 = vld [vmem:[#allocation2 + $0x48] sm:$0xff]
    %v63 = vld [vmem:[#allocation2 + $0x50] sm:$0xff]
    %v64 = vld [vmem:[#allocation2 + $0x58] sm:$0xff]
    %v65 = vld [vmem:[#allocation2 + $0x60] sm:$0xff]
    %v66 = vld [vmem:[#allocation2 + $0x68] sm:$0xff]
    %v67 = vld [vmem:[#allocation2 + $0x70] sm:$0xff]
    %v68 = vld [vmem:[#allocation2 + $0x78] sm:$0xff]
    %v69 = vld [vmem:[#allocation2 + $0x80] sm:$0xff]
    %v70 = vld [vmem:[#allocation2 + $0x88] sm:$0xff]
    %v71 = vld [vmem:[#allocation2 + $0x90] sm:$0xff]
    %v72 = vld [vmem:[#allocation2 + $0x98] sm:$0xff]
    %v73 = vld [vmem:[#allocation2 + $0xa0] sm:$0xff]
    %v74 = vld [vmem:[#allocation2 + $0xa8] sm:$0xff]
    %v75 = vld [vmem:[#allocation2 + $0xb0] sm:$0xff]
    %v76 = vld [vmem:[#allocation2 + $0xb8] sm:$0xff]
    %v77 = vld [vmem:[#allocation2 + $0xc0] sm:$0xff]
    %v78 = vld [vmem:[#allocation2 + $0xc8] sm:$0xff]
    %v79 = vld [vmem:[#allocation2 + $0xd0] sm:$0xff]
    %v80 = vld [vmem:[#allocation2 + $0xd8] sm:$0xff]
    %v81 = vld [vmem:[#allocation2 + $0xe0] sm:$0xff]
    %v82 = vld [vmem:[#allocation2 + $0xe8] sm:$0xff]
    %v83 = vld [vmem:[#allocation2 + $0xf0] sm:$0xff]
    %v84 = vld [vmem:[#allocation2 + $0xf8] sm:$0xff]
    %v85 = vld [vmem:[#allocation2 + $0x100] sm:$0xff]
    %v86 = vld [vmem:[#allocation2 + $0x108] sm:$0xff]
    %v87 = vld [vmem:[#allocation2 + $0x110] sm:$0xff]
    %v88 = vld [vmem:[#allocation2 + $0x118] sm:$0xff]
    %v89 = vld [vmem:[#allocation2 + $0x120] sm:$0xff]
    %v90 = vld [vmem:[#allocation2 + $0x128] sm:$0xff]
    %v91 = vld [vmem:[#allocation2 + $0x130] sm:$0xff]
    %v92 = vld [vmem:[#allocation2 + $0x138] sm:$0xff]
    %v93 = vld [vmem:[#allocation2 + $0x140] sm:$0xff]
    %v94 = vld [vmem:[#allocation2 + $0x148] sm:$0xff]
    %v95 = vld [vmem:[#allocation2 + $0x150] sm:$0xff]
    %v96 = vld [vmem:[#allocation2 + $0x158] sm:$0xff]
    %v97 = vld [vmem:[#allocation2 + $0x160] sm:$0xff]
    %v98 = vld [vmem:[#allocation2 + $0x168] sm:$0xff]
    %v99 = vld [vmem:[#allocation2 + $0x170] sm:$0xff]
    %v100 = vld [vmem:[#allocation2 + $0x178] sm:$0xff]
    %v101 = vld [vmem:[#allocation2 + $0x180] sm:$0xff]
    %v102 = vld [vmem:[#allocation2 + $0x188] sm:$0xff]
    %v103 = vld [vmem:[#allocation2 + $0x190] sm:$0xff]
    %v104 = vld [vmem:[#allocation2 + $0x198] sm:$0xff]
    %v105 = vld [vmem:[#allocation2 + $0x1a0] sm:$0xff]
    %v106 = vld [vmem:[#allocation2 + $0x1a8] sm:$0xff]
    %v107 = vld [vmem:[#allocation2 + $0x1b0] sm:$0xff]
    %v108 = vld [vmem:[#allocation2 + $0x1b8] sm:$0xff]
    %v109 = vld [vmem:[#allocation2 + $0x1c0] sm:$0xff]
    %v110 = vld [vmem:[#allocation2 + $0x1c8] sm:$0xff]
    %v111 = vld [vmem:[#allocation2 + $0x1d0] sm:$0xff]
    %v112 = vld [vmem:[#allocation2 + $0x1d8] sm:$0xff]
    %v113 = vld [vmem:[#allocation2 + $0x1e0] sm:$0xff]
    %v114 = vld [vmem:[#allocation2 + $0x1e8] sm:$0xff]
    %v115 = vld [vmem:[#allocation2 + $0x1f0] sm:$0xff]
    %v116 = vld [vmem:[#allocation2 + $0x1f8] sm:$0xff]
    %v117 = vld [vmem:[%s2] sm:$0xf]
    %v119 = vperm.slane %v117, 0
    %v120 = vperm.slane %v117, 1
    %v121 = vperm.slane %v117, 2
    %v122 = vperm.slane %v117, 3
    %127 = vmatpush.msra.mxu0 %v113
    %128 = vmatpush.msra.mxu0 %v109
    %129 = vmatpush.msra.mxu0 %v105
    %130 = vmatpush.msra.mxu0 %v101
    %131 = vmatpush.msra.mxu0 %v97
    %132 = vmatpush.msra.mxu0 %v93
    %133 = vmatpush.msra.mxu0 %v89
    %134 = vmatpush.msra.mxu0 %v85
    %135 = vmatpush.msra.mxu0 %v81
    %136 = vmatpush.msra.mxu0 %v77
    %137 = vmatpush.msra.mxu0 %v73
    %138 = vmatpush.msra.mxu0 %v69
    %139 = vmatpush.msra.mxu0 %v65
    %140 = vmatpush.msra.mxu0 %v61
    %141 = vmatpush.msra.mxu0 %v57
    %142 = vmatpush.msra.mxu0 %v53
    %143 = vmatmul.f32.gmra.mxu0 %v52
    %v144 = vpop.f32.mrf.mxu0
    %v145 = vadd.f32 %v119, %v144
    %146 = vdwg.mxu0
    %147 = vmatpush.msra.mxu0 %v114
    %148 = vmatpush.msra.mxu0 %v110
    %149 = vmatpush.msra.mxu0 %v106
    %150 = vmatpush.msra.mxu0 %v102
    %151 = vmatpush.msra.mxu0 %v98
    %152 = vmatpush.msra.mxu0 %v94
    %153 = vmatpush.msra.mxu0 %v90
    %154 = vmatpush.msra.mxu0 %v86
    %155 = vmatpush.msra.mxu0 %v82
    %156 = vmatpush.msra.mxu0 %v78
    %157 = vmatpush.msra.mxu0 %v74
    %158 = vmatpush.msra.mxu0 %v70
    %159 = vmatpush.msra.mxu0 %v66
    %160 = vmatpush.msra.mxu0 %v62
    %161 = vmatpush.msra.mxu0 %v58
    %162 = vmatpush.msra.mxu0 %v54
    %163 = vmatmul.f32.gmra.mxu0 %v52
    %v164 = vpop.f32.mrf.mxu0
    %v165 = vadd.f32 %v120, %v164
    %166 = vdwg.mxu0
    %167 = vmatpush.msra.mxu0 %v115
    %168 = vmatpush.msra.mxu0 %v111
    %169 = vmatpush.msra.mxu0 %v107
    %170 = vmatpush.msra.mxu0 %v103
    %171 = vmatpush.msra.mxu0 %v99
    %172 = vmatpush.msra.mxu0 %v95
    %173 = vmatpush.msra.mxu0 %v91
    %174 = vmatpush.msra.mxu0 %v87
    %175 = vmatpush.msra.mxu0 %v83
    %176 = vmatpush.msra.mxu0 %v79
    %177 = vmatpush.msra.mxu0 %v75
    %178 = vmatpush.msra.mxu0 %v71
    %179 = vmatpush.msra.mxu0 %v67
    %180 = vmatpush.msra.mxu0 %v63
    %181 = vmatpush.msra.mxu0 %v59
    %182 = vmatpush.msra.mxu0 %v55
    %183 = vmatmul.f32.gmra.mxu0 %v52
    %v184 = vpop.f32.mrf.mxu0
    %v185 = vadd.f32 %v121, %v184
    %186 = vdwg.mxu0
    %187 = vmatpush.msra.mxu0 %v116
    %188 = vmatpush.msra.mxu0 %v112
    %189 = vmatpush.msra.mxu0 %v108
    %190 = vmatpush.msra.mxu0 %v104
    %191 = vmatpush.msra.mxu0 %v100
    %192 = vmatpush.msra.mxu0 %v96
    %193 = vmatpush.msra.mxu0 %v92
    %194 = vmatpush.msra.mxu0 %v88
    %195 = vmatpush.msra.mxu0 %v84
    %196 = vmatpush.msra.mxu0 %v80
    %197 = vmatpush.msra.mxu0 %v76
    %198 = vmatpush.msra.mxu0 %v72
    %199 = vmatpush.msra.mxu0 %v68
    %200 = vmatpush.msra.mxu0 %v64
    %201 = vmatpush.msra.mxu0 %v60
    %202 = vmatpush.msra.mxu0 %v56
    %203 = vmatmul.f32.gmra.mxu0 %v52
    %v204 = vpop.f32.mrf.mxu0
    %v205 = vadd.f32 %v122, %v204
    %206 = vdwg.mxu0
    %v207 = vmax.f32 %v145, 0.0
    %v208 = vmax.f32 %v165, 0.0
    %v209 = vmax.f32 %v185, 0.0
    %v210 = vmax.f32 %v205, 0.0
    %v211 = vld [vmem:[#allocation4] sm:$0xff]
    %v212 = vld [vmem:[#allocation4 + $0x8] sm:$0xff]
    %v213 = vld [vmem:[#allocation4 + $0x10] sm:$0xff]
    %v214 = vld [vmem:[#allocation4 + $0x18] sm:$0xff]
    %v215 = vld [vmem:[#allocation4 + $0x20] sm:$0xff]
    %v216 = vld [vmem:[#allocation4 + $0x28] sm:$0xff]
    %v217 = vld [vmem:[#allocation4 + $0x30] sm:$0xff]
    %v218 = vld [vmem:[#allocation4 + $0x38] sm:$0xff]
    %v219 = vld [vmem:[#allocation4 + $0x40] sm:$0xff]
    %v220 = vld [vmem:[#allocation4 + $0x48] sm:$0xff]
    %v221 = vld [vmem:[#allocation4 + $0x50] sm:$0xff]
    %v222 = vld [vmem:[#allocation4 + $0x58] sm:$0xff]
    %v223 = vld [vmem:[#allocation4 + $0x60] sm:$0xff]
    %v224 = vld [vmem:[#allocation4 + $0x68] sm:$0xff]
    %v225 = vld [vmem:[#allocation4 + $0x70] sm:$0xff]
    %v226 = vld [vmem:[#allocation4 + $0x78] sm:$0xff]
    %v227 = vld [vmem:[#allocation4 + $0x80] sm:$0xff]
    %v228 = vld [vmem:[#allocation4 + $0x88] sm:$0xff]
    %v229 = vld [vmem:[#allocation4 + $0x90] sm:$0xff]
    %v230 = vld [vmem:[#allocation4 + $0x98] sm:$0xff]
    %v231 = vld [vmem:[#allocation4 + $0xa0] sm:$0xff]
    %v232 = vld [vmem:[#allocation4 + $0xa8] sm:$0xff]
    %v233 = vld [vmem:[#allocation4 + $0xb0] sm:$0xff]
    %v234 = vld [vmem:[#allocation4 + $0xb8] sm:$0xff]
    %v235 = vld [vmem:[#allocation4 + $0xc0] sm:$0xff]
    %v236 = vld [vmem:[#allocation4 + $0xc8] sm:$0xff]
    %v237 = vld [vmem:[#allocation4 + $0xd0] sm:$0xff]
    %v238 = vld [vmem:[#allocation4 + $0xd8] sm:$0xff]
    %v239 = vld [vmem:[#allocation4 + $0xe0] sm:$0xff]
    %v240 = vld [vmem:[#allocation4 + $0xe8] sm:$0xff]
    %v241 = vld [vmem:[#allocation4 + $0xf0] sm:$0xff]
    %v242 = vld [vmem:[#allocation4 + $0xf8] sm:$0xff]
    %v243 = vld [vmem:[#allocation4 + $0x100] sm:$0xff]
    %v244 = vld [vmem:[#allocation4 + $0x108] sm:$0xff]
    %v245 = vld [vmem:[#allocation4 + $0x110] sm:$0xff]
    %v246 = vld [vmem:[#allocation4 + $0x118] sm:$0xff]
    %v247 = vld [vmem:[#allocation4 + $0x120] sm:$0xff]
    %v248 = vld [vmem:[#allocation4 + $0x128] sm:$0xff]
    %v249 = vld [vmem:[#allocation4 + $0x130] sm:$0xff]
    %v250 = vld [vmem:[#allocation4 + $0x138] sm:$0xff]
    %v251 = vld [vmem:[#allocation4 + $0x140] sm:$0xff]
    %v252 = vld [vmem:[#allocation4 + $0x148] sm:$0xff]
    %v253 = vld [vmem:[#allocation4 + $0x150] sm:$0xff]
    %v254 = vld [vmem:[#allocation4 + $0x158] sm:$0xff]
    %v255 = vld [vmem:[#allocation4 + $0x160] sm:$0xff]
    %v256 = vld [vmem:[#allocation4 + $0x168] sm:$0xff]
    %v257 = vld [vmem:[#allocation4 + $0x170] sm:$0xff]
    %v258 = vld [vmem:[#allocation4 + $0x178] sm:$0xff]
    %v259 = vld [vmem:[#allocation4 + $0x180] sm:$0xff]
    %v260 = vld [vmem:[#allocation4 + $0x188] sm:$0xff]
    %v261 = vld [vmem:[#allocation4 + $0x190] sm:$0xff]
    %v262 = vld [vmem:[#allocation4 + $0x198] sm:$0xff]
    %v263 = vld [vmem:[#allocation4 + $0x1a0] sm:$0xff]
    %v264 = vld [vmem:[#allocation4 + $0x1a8] sm:$0xff]
    %v265 = vld [vmem:[#allocation4 + $0x1b0] sm:$0xff]
    %v266 = vld [vmem:[#allocation4 + $0x1b8] sm:$0xff]
    %v267 = vld [vmem:[#allocation4 + $0x1c0] sm:$0xff]
    %v268 = vld [vmem:[#allocation4 + $0x1c8] sm:$0xff]
    %v269 = vld [vmem:[#allocation4 + $0x1d0] sm:$0xff]
    %v270 = vld [vmem:[#allocation4 + $0x1d8] sm:$0xff]
    %v271 = vld [vmem:[#allocation4 + $0x1e0] sm:$0xff]
    %v272 = vld [vmem:[#allocation4 + $0x1e8] sm:$0xff]
    %v273 = vld [vmem:[#allocation4 + $0x1f0] sm:$0xff]
    %v274 = vld [vmem:[#allocation4 + $0x1f8] sm:$0xff]
    %v275 = vld [vmem:[%s4] sm:$0x1]
    %v277 = vperm.slane %v275, 0
    %279 = vmatpush.msra.mxu0 %v226
    %280 = vmatpush.msra.mxu0 %v225
    %281 = vmatpush.msra.mxu0 %v224
    %282 = vmatpush.msra.mxu0 %v223
    %283 = vmatpush.msra.mxu0 %v222
    %284 = vmatpush.msra.mxu0 %v221
    %285 = vmatpush.msra.mxu0 %v220
    %286 = vmatpush.msra.mxu0 %v219
    %287 = vmatpush.msra.mxu0 %v218
    %288 = vmatpush.msra.mxu0 %v217
    %289 = vmatpush.msra.mxu0 %v216
    %290 = vmatpush.msra.mxu0 %v215
    %291 = vmatpush.msra.mxu0 %v214
    %292 = vmatpush.msra.mxu0 %v213
    %293 = vmatpush.msra.mxu0 %v212
    %294 = vmatpush.msra.mxu0 %v211
    %295 = vmatmul.f32.gmra.mxu0 %v207
    %v296 = vpop.f32.mrf.mxu0
    %v297 = vadd.f32 %v277, %v296
    %298 = vdwg.mxu0
    %299 = vmatpush.msra.mxu0 %v242
    %300 = vmatpush.msra.mxu0 %v241
    %301 = vmatpush.msra.mxu0 %v240
    %302 = vmatpush.msra.mxu0 %v239
    %303 = vmatpush.msra.mxu0 %v238
    %304 = vmatpush.msra.mxu0 %v237
    %305 = vmatpush.msra.mxu0 %v236
    %306 = vmatpush.msra.mxu0 %v235
    %307 = vmatpush.msra.mxu0 %v234
    %308 = vmatpush.msra.mxu0 %v233
    %309 = vmatpush.msra.mxu0 %v232
    %310 = vmatpush.msra.mxu0 %v231
    %311 = vmatpush.msra.mxu0 %v230
    %312 = vmatpush.msra.mxu0 %v229
    %313 = vmatpush.msra.mxu0 %v228
    %314 = vmatpush.msra.mxu0 %v227
    %315 = vmatmul.f32.gmra.mxu0 %v208
    %v316 = vpop.f32.mrf.mxu0
    %v317 = vadd.f32 %v297, %v316
    %318 = vdwg.mxu0
    %319 = vmatpush.msra.mxu0 %v258
    %320 = vmatpush.msra.mxu0 %v257
    %321 = vmatpush.msra.mxu0 %v256
    %322 = vmatpush.msra.mxu0 %v255
    %323 = vmatpush.msra.mxu0 %v254
    %324 = vmatpush.msra.mxu0 %v253
    %325 = vmatpush.msra.mxu0 %v252
    %326 = vmatpush.msra.mxu0 %v251
    %327 = vmatpush.msra.mxu0 %v250
    %328 = vmatpush.msra.mxu0 %v249
    %329 = vmatpush.msra.mxu0 %v248
    %330 = vmatpush.msra.mxu0 %v247
    %331 = vmatpush.msra.mxu0 %v246
    %332 = vmatpush.msra.mxu0 %v245
    %333 = vmatpush.msra.mxu0 %v244
    %334 = vmatpush.msra.mxu0 %v243
    %335 = vmatmul.f32.gmra.mxu0 %v209
    %v336 = vpop.f32.mrf.mxu0
    %v337 = vadd.f32 %v317, %v336
    %338 = vdwg.mxu0
    %339 = vmatpush.msra.mxu0 %v274
    %340 = vmatpush.msra.mxu0 %v273
    %341 = vmatpush.msra.mxu0 %v272
    %342 = vmatpush.msra.mxu0 %v271
    %343 = vmatpush.msra.mxu0 %v270
    %344 = vmatpush.msra.mxu0 %v269
    %345 = vmatpush.msra.mxu0 %v268
    %346 = vmatpush.msra.mxu0 %v267
    %347 = vmatpush.msra.mxu0 %v266
    %348 = vmatpush.msra.mxu0 %v265
    %349 = vmatpush.msra.mxu0 %v264
    %350 = vmatpush.msra.mxu0 %v263
    %351 = vmatpush.msra.mxu0 %v262
    %352 = vmatpush.msra.mxu0 %v261
    %353 = vmatpush.msra.mxu0 %v260
    %354 = vmatpush.msra.mxu0 %v259
    %355 = vmatmul.f32.gmra.mxu0 %v210
    %v356 = vpop.f32.mrf.mxu0
    %v357 = vadd.f32 %v337, %v356
    %358 = vdwg.mxu0
    %359 = vst [vmem:[%s5] sm:$0xff] %v357
    // Predicated region
    $region30: #{apply_ffn.1} parent=1 // pred_check
      _
    $region31: #{apply_ffn.1} parent=1 // pred_check_branch
      %361 = sbr.rel (0) target = $region33
    $region32: #{apply_ffn.1} parent=1 // pred_region
      _
    $region33: #{apply_ffn.1} parent=1 // pred_fallthru
      _
    // Predicated region
    $region34: #{apply_ffn.1} parent=1 // pred_check
      _
    $region35: #{apply_ffn.1} parent=1 // pred_check_branch
      %363 = sbr.rel (0) target = $region37
    $region36: #{apply_ffn.1} parent=1 // pred_region
      _
    $region37: #{apply_ffn.1} parent=1 // pred_fallthru
      _
    %364 = vsyncpa [#allocation3], 1
    %365 = vsyncpa [#allocation5], 1

</llo_original>
